<compile_context>
chip_gen: v7x
topology: tpu7x:2x2x1
jax: 0.10.0
libtpu: 0.0.40
codegen_flags: <defaults>
</compile_context>

<pallas_src>
import math

import jax
import jax.numpy as jnp
from jax.experimental import pallas as pl
from jax.experimental.pallas import tpu as pltpu

SEED = 0


def _round_up(x, m):
    return ((x + m - 1) // m) * m


def _pick_tile(n_pad, preferred):
    """Largest tile <= preferred that divides n_pad (n_pad is a multiple of 128)."""
    t = min(preferred, n_pad)
    while n_pad % t:
        t //= 2
    return max(t, 128)


# ----------------------------------------------------------------------------
# Pallas kernel: one fused SAGEConv layer (+ ReLU), tiled over (row, neighbor)
#   aggr   = sum_k A[i-tile, k-tile] @ X[k-tile, :]          (f32 accumulator)
#   out[i] = relu( concat([aggr, x_self]) @ [Wl_T ; Wr_T] + b )   at k == last
# ----------------------------------------------------------------------------
def sage_layer_kernel(a_ref, xn_ref, xs_ref, w_ref, b_ref, o_ref, acc_ref):
    k = pl.program_id(1)

    @pl.when(k == 0)
    def _init():
        acc_ref[...] = jnp.zeros_like(acc_ref)

    # Accumulate mean-aggregated neighbor features (bf16 MXU, f32 accumulate).
    acc_ref[...] += jnp.dot(
        a_ref[...], xn_ref[...], preferred_element_type=jnp.float32
    )

    @pl.when(k == pl.num_programs(1) - 1)
    def _finalize():
        aggr = acc_ref[...].astype(jnp.bfloat16)              # (tm, Dp_in)
        feats = jnp.concatenate([aggr, xs_ref[...]], axis=-1)  # (tm, 2*Dp_in)
        h = jnp.dot(feats, w_ref[...], preferred_element_type=jnp.float32)
        h = h + b_ref[...]
        # dropout (eval mode) is identity; ReLU activation
        o_ref[...] = jnp.maximum(h, 0.0).astype(o_ref.dtype)


def sage_layer(a, x, w_stack, b, *, tm, tk):
    """One fused SAGE layer on padded/bf16 operands.

    a:       (N_pad, N_pad)      bf16  row-normalized adjacency
    x:       (N_pad, Dp_in)      bf16  node features (padded)
    w_stack: (2*Dp_in, Dp_out)   bf16  [Wl_T ; Wr_T]
    b:       (1, Dp_out)         f32   bias (padded)
    returns  (N_pad, Dp_out)     bf16
    """
    n_pad, dp_in = x.shape
    dp_out = w_stack.shape[1]
    grid = (n_pad // tm, n_pad // tk)

    return pl.pallas_call(
        sage_layer_kernel,
        out_shape=jax.ShapeDtypeStruct((n_pad, dp_out), jnp.bfloat16),
        grid_spec=pltpu.PrefetchScalarGridSpec(
            num_scalar_prefetch=0,
            grid=grid,
            in_specs=[
                # adjacency tile (tm, tk)
                pl.BlockSpec((tm, tk), lambda i, k: (i, k)),
                # neighbor feature rows (tk, Dp_in)
                pl.BlockSpec((tk, dp_in), lambda i, k: (k, 0)),
                # self feature rows (tm, Dp_in)
                pl.BlockSpec((tm, dp_in), lambda i, k: (i, 0)),
                # stacked weights: constant index_map -> resident in VMEM
                pl.BlockSpec((2 * dp_in, dp_out), lambda i, k: (0, 0)),
                # bias: constant index_map -> resident in VMEM
                pl.BlockSpec((1, dp_out), lambda i, k: (0, 0)),
            ],
            out_specs=pl.BlockSpec((tm, dp_out), lambda i, k: (i, 0)),
            scratch_shapes=[pltpu.VMEM((tm, dp_in), jnp.float32)],
        ),
        compiler_params=pltpu.CompilerParams(
            dimension_semantics=("parallel", "arbitrary")
        ),
    )(a, x, x, w_stack, b)


# ----------------------------------------------------------------------------
# Parameter init (deterministic, PyTorch nn.Linear-style uniform bounds)
# ----------------------------------------------------------------------------
def init_linear(key, in_dim, out_dim, bias=True):
    kw, kb = jax.random.split(key)
    bound = 1.0 / math.sqrt(in_dim)
    w = jax.random.uniform(kw, (out_dim, in_dim), jnp.float32, -bound, bound)
    if bias:
        b = jax.random.uniform(kb, (1, out_dim), jnp.float32, -bound, bound)
    else:
        b = jnp.zeros((1, out_dim), jnp.float32)
    return w, b


def init_gnn_encoder_params(key, input_dim, hidden_dims):
    params = []
    prev = input_dim
    for dim in hidden_dims:
        key, k1, k2 = jax.random.split(key, 3)
        wl, bl = init_linear(k1, prev, dim, bias=True)   # lin_l (neighbors)
        wr, _ = init_linear(k2, prev, dim, bias=False)   # lin_r (root), no bias

        dp_in = _round_up(prev, 128)
        dp_out = _round_up(dim, 128)
        # zero-pad to lane-dense shapes, pre-transpose to [D_in, D_out]
        wl_t = jnp.zeros((dp_in, dp_out), jnp.float32).at[:prev, :dim].set(wl.T)
        wr_t = jnp.zeros((dp_in, dp_out), jnp.float32).at[:prev, :dim].set(wr.T)
        w_stack = jnp.concatenate([wl_t, wr_t], axis=0).astype(jnp.bfloat16)
        b_pad = jnp.zeros((1, dp_out), jnp.float32).at[:, :dim].set(bl)

        params.append(
            dict(
                w=w_stack, b=b_pad,
                d_in=prev, d_out=dim, dp_in=dp_in, dp_out=dp_out,
                # unpadded f32 copies for the pure-JAX references
                wl_ref=wl.T, wr_ref=wr.T, b_ref=bl,
            )
        )
        prev = dim
    return params


# ----------------------------------------------------------------------------
# Glue: row-normalized dense adjacency (mean aggregation matrix), padded, bf16
# ----------------------------------------------------------------------------
def build_mean_adjacency(edge_index, num_nodes, n_pad, dtype=jnp.bfloat16):
    src, dst = edge_index[0], edge_index[1]
    a = jnp.zeros((n_pad, n_pad), jnp.float32)
    a = a.at[dst, src].add(1.0)                     # A[i, j] = #edges j -> i
    deg = a.sum(axis=1, keepdims=True)
    a = a / jnp.maximum(deg, 1.0)                   # isolated nodes aggregate 0
    return a.astype(dtype)


# ----------------------------------------------------------------------------
# GNNEncoder forward (hetero dicts, single node / edge type)
# ----------------------------------------------------------------------------
def gnn_encoder_forward(params, x_dict, edge_index_dict, *, tm_pref=256, tk_pref=512):
    node_type = "node"
    edge_type = ("node", "to", "node")
    x = x_dict[node_type]
    n, d_in = x.shape

    n_pad = max(_round_up(n, 128), 128)
    tm = _pick_tile(n_pad, tm_pref)
    tk = _pick_tile(n_pad, tk_pref)

    a = build_mean_adjacency(edge_index_dict[edge_type], n, n_pad)

    dp0 = params[0]["dp_in"]
    h = jnp.zeros((n_pad, dp0), jnp.float32).at[:n, :d_in].set(x)
    h = h.astype(jnp.bfloat16)

    for p in params:
        h = sage_layer(a, h, p["w"], p["b"], tm=tm, tk=tk)

    out = h[:n, : params[-1]["d_out"]].astype(jnp.float32)
    return {node_type: out}


# ----------------------------------------------------------------------------
# Pure-JAX references
#   * f32 reference (exact module semantics)
#   * bf16-emulating reference (same precision choices as the kernel)
# ----------------------------------------------------------------------------
def _dense_adj_f32(edge_index, n):
    src, dst = edge_index[0], edge_index[1]
    a = jnp.zeros((n, n), jnp.float32).at[dst, src].add(1.0)
    return a / jnp.maximum(a.sum(axis=1, keepdims=True), 1.0)


def reference_forward_f32(params, x_dict, edge_index_dict):
    x = x_dict["node"]
    a = _dense_adj_f32(edge_index_dict[("node", "to", "node")], x.shape[0])
    for p in params:
        h = (a @ x) @ p["wl_ref"] + x @ p["wr_ref"] + p["b_ref"]
        x = jnp.maximum(h, 0.0)
    return {"node": x}


def reference_forward_bf16(params, x_dict, edge_index_dict):
    x = x_dict["node"].astype(jnp.bfloat16)
    a = _dense_adj_f32(
        edge_index_dict[("node", "to", "node")], x.shape[0]
    ).astype(jnp.bfloat16)
    for p in params:
        aggr = jnp.dot(a, x, preferred_element_type=jnp.float32).astype(jnp.bfloat16)
        h = jnp.dot(aggr, p["wl_ref"].astype(jnp.bfloat16),
                    preferred_element_type=jnp.float32)
        h = h + jnp.dot(x, p["wr_ref"].astype(jnp.bfloat16),
                        preferred_element_type=jnp.float32)
        h = h + p["b_ref"]
        x = jnp.maximum(h, 0.0).astype(jnp.bfloat16)
    return {"node": x.astype(jnp.float32)}


if __name__ == "__main__":
    key = jax.random.PRNGKey(0)

    num_nodes = 8
    input_dim = 16
    hidden_dims = (32, 32)
    num_edges = 16

    key, kx, ke, kp = jax.random.split(key, 4)
    x = jax.random.normal(kx, (num_nodes, input_dim), jnp.float32)
    edge_index = jax.random.randint(ke, (2, num_edges), 0, num_nodes, jnp.int32)

    x_dict = {"node": x}
    edge_index_dict = {("node", "to", "node"): edge_index}

    params = init_gnn_encoder_params(kp, input_dim, hidden_dims)

    out = gnn_encoder_forward(params, x_dict, edge_index_dict)
    out = jax.tree_util.tree_map(jax.block_until_ready, out)
    y = out["node"]
    assert y.shape == (num_nodes, hidden_dims[-1])

    # Tight check against a reference that emulates the kernel's bf16/f32 mix.
    ref_bf16 = reference_forward_bf16(params, x_dict, edge_index_dict)["node"]
    assert jnp.allclose(y, ref_bf16, atol=1e-3, rtol=1e-3), (
        float(jnp.max(jnp.abs(y - ref_bf16)))
    )

    # Looser check against the exact f32 module semantics (bf16 storage error).
    ref_f32 = reference_forward_f32(params, x_dict, edge_index_dict)["node"]
    assert jnp.allclose(y, ref_f32, atol=5e-2, rtol=5e-2), (
        float(jnp.max(jnp.abs(y - ref_f32)))
    )

    print("KERNEL_OK")
</pallas_src>

<mosaic_0001>
module attributes {stable_mosaic.version = 11 : i64} {
  func.func @sage_layer_kernel(%arg0: i32, %arg1: i32, %arg2: memref<128x128xbf16, #tpu.memory_space<vmem>>, %arg3: memref<128x128xbf16, #tpu.memory_space<vmem>>, %arg4: memref<128x128xbf16, #tpu.memory_space<vmem>>, %arg5: memref<256x128xbf16, #tpu.memory_space<vmem>>, %arg6: memref<1x128xf32, #tpu.memory_space<vmem>>, %arg7: memref<128x128xbf16, #tpu.memory_space<vmem>>, %arg8: memref<128x128xf32, #tpu.memory_space<vmem>>) attributes {dimension_semantics = [#tpu.dimension_semantics<parallel>, #tpu.dimension_semantics<arbitrary>], iteration_bounds = array<i64: 1, 1>, scalar_prefetch = 0 : i64, scratch_operands = 1 : i64, tpu.core_type = #tpu.core_type<tc>, window_params = [{transform_indices = @transform_0, window_bounds = array<i64: 128, 128>}, {transform_indices = @transform_1, window_bounds = array<i64: 128, 128>}, {transform_indices = @transform_2, window_bounds = array<i64: 128, 128>}, {pipeline_mode = #tpu.pipeline_mode<synchronous>, transform_indices = @transform_3, window_bounds = array<i64: 256, 128>}, {pipeline_mode = #tpu.pipeline_mode<synchronous>, transform_indices = @transform_4, window_bounds = array<i64: 1, 128>}, {transform_indices = @transform_5, window_bounds = array<i64: 128, 128>}]} {
    %c0_i32 = arith.constant 0 : i32
    %0 = arith.cmpi eq, %arg1, %c0_i32 : i32
    %1 = arith.extui %0 : i1 to i32
    %c0_i32_0 = arith.constant 0 : i32
    %2 = arith.cmpi ne, %1, %c0_i32_0 : i32
    scf.if %2 {
      %cst_10 = arith.constant 0.000000e+00 : f32
      %12 = vector.broadcast %cst_10 : f32 to vector<128x128xf32>
      %c0_11 = arith.constant 0 : index
      %c0_12 = arith.constant 0 : index
      %13 = vector.load %arg8[%c0_11, %c0_12] : memref<128x128xf32, #tpu.memory_space<vmem>>, vector<128x128xf32>
      tpu.vector_store %arg8[%c0_11, %c0_12], %12 {strides = array<i32>} : memref<128x128xf32, #tpu.memory_space<vmem>>, vector<128x128xf32>,
    } else {
    }
    %c0 = arith.constant 0 : index
    %c0_1 = arith.constant 0 : index
    %3 = vector.load %arg8[%c0, %c0_1] : memref<128x128xf32, #tpu.memory_space<vmem>>, vector<128x128xf32>
    %c0_2 = arith.constant 0 : index
    %c0_3 = arith.constant 0 : index
    %4 = vector.load %arg2[%c0_2, %c0_3] : memref<128x128xbf16, #tpu.memory_space<vmem>>, vector<128x128xbf16>
    %c0_4 = arith.constant 0 : index
    %c0_5 = arith.constant 0 : index
    %5 = vector.load %arg3[%c0_4, %c0_5] : memref<128x128xbf16, #tpu.memory_space<vmem>>, vector<128x128xbf16>
    %cst = arith.constant dense<0.000000e+00> : vector<128x128xf32>
    %6 = tpu.matmul %4, %5, %cst {dimension_numbers = #tpu.dot_dimension_numbers<[1], [0], [0], [1], [0, 0, 1, 1], [], []>} : vector<128x128xbf16>, vector<128x128xbf16>, vector<128x128xf32> -> vector<128x128xf32>
    %7 = arith.addf %3, %6 : vector<128x128xf32>
    %c0_6 = arith.constant 0 : index
    %c0_7 = arith.constant 0 : index
    %8 = vector.load %arg8[%c0_6, %c0_7] : memref<128x128xf32, #tpu.memory_space<vmem>>, vector<128x128xf32>
    tpu.vector_store %arg8[%c0_6, %c0_7], %7 {strides = array<i32>} : memref<128x128xf32, #tpu.memory_space<vmem>>, vector<128x128xf32>,
    %c0_i32_8 = arith.constant 0 : i32
    %9 = arith.cmpi eq, %arg1, %c0_i32_8 : i32
    %10 = arith.extui %9 : i1 to i32
    %c0_i32_9 = arith.constant 0 : i32
    %11 = arith.cmpi ne, %10, %c0_i32_9 : i32
    scf.if %11 {
      %c0_10 = arith.constant 0 : index
      %c0_11 = arith.constant 0 : index
      %12 = vector.load %arg8[%c0_10, %c0_11] : memref<128x128xf32, #tpu.memory_space<vmem>>, vector<128x128xf32>
      %13 = arith.truncf %12 : vector<128x128xf32> to vector<128x128xbf16>
      %c0_12 = arith.constant 0 : index
      %c0_13 = arith.constant 0 : index
      %14 = vector.load %arg4[%c0_12, %c0_13] : memref<128x128xbf16, #tpu.memory_space<vmem>>, vector<128x128xbf16>
      %15 = tpu.concatenate %13, %14 in 1 : vector<128x128xbf16>, vector<128x128xbf16> -> vector<128x256xbf16>
      %c0_14 = arith.constant 0 : index
      %c0_15 = arith.constant 0 : index
      %16 = vector.load %arg5[%c0_14, %c0_15] : memref<256x128xbf16, #tpu.memory_space<vmem>>, vector<256x128xbf16>
      %cst_16 = arith.constant dense<0.000000e+00> : vector<128x128xf32>
      %17 = tpu.matmul %15, %16, %cst_16 {dimension_numbers = #tpu.dot_dimension_numbers<[1], [0], [0], [1], [0, 0, 1, 1], [], []>} : vector<128x256xbf16>, vector<256x128xbf16>, vector<128x128xf32> -> vector<128x128xf32>
      %c0_17 = arith.constant 0 : index
      %c0_18 = arith.constant 0 : index
      %18 = vector.load %arg6[%c0_17, %c0_18] : memref<1x128xf32, #tpu.memory_space<vmem>>, vector<1x128xf32>
      %19 = vector.broadcast %18 : vector<1x128xf32> to vector<128x128xf32>
      %20 = arith.addf %17, %19 : vector<128x128xf32>
      %cst_19 = arith.constant 0.000000e+00 : f32
      %21 = vector.broadcast %cst_19 : f32 to vector<128x128xf32>
      %22 = arith.maximumf %20, %21 : vector<128x128xf32>
      %23 = arith.truncf %22 : vector<128x128xf32> to vector<128x128xbf16>
      %c0_20 = arith.constant 0 : index
      %c0_21 = arith.constant 0 : index
      %24 = vector.load %arg7[%c0_20, %c0_21] : memref<128x128xbf16, #tpu.memory_space<vmem>>, vector<128x128xbf16>
      tpu.vector_store %arg7[%c0_20, %c0_21], %23 {strides = array<i32>} : memref<128x128xbf16, #tpu.memory_space<vmem>>, vector<128x128xbf16>,
    } else {
    }
    return
  }
  func.func @transform_0(%arg0: i32, %arg1: i32) -> (i32, i32) {
    %c0_i32 = arith.constant 0 : i32
    return %arg0, %arg1 : i32, i32
  }
  func.func @transform_1(%arg0: i32, %arg1: i32) -> (i32, i32) {
    %c0_i32 = arith.constant 0 : i32
    %c0_i32_0 = arith.constant 0 : i32
    return %arg1, %c0_i32 : i32, i32
  }
  func.func @transform_2(%arg0: i32, %arg1: i32) -> (i32, i32) {
    %c0_i32 = arith.constant 0 : i32
    %c0_i32_0 = arith.constant 0 : i32
    return %arg0, %c0_i32 : i32, i32
  }
  func.func @transform_3(%arg0: i32, %arg1: i32) -> (i32, i32) {
    %c0_i32 = arith.constant 0 : i32
    %c0_i32_0 = arith.constant 0 : i32
    %c0_i32_1 = arith.constant 0 : i32
    return %c0_i32, %c0_i32_0 : i32, i32
  }
  func.func @transform_4(%arg0: i32, %arg1: i32) -> (i32, i32) {
    %c0_i32 = arith.constant 0 : i32
    %c0_i32_0 = arith.constant 0 : i32
    %c0_i32_1 = arith.constant 0 : i32
    return %c0_i32, %c0_i32_0 : i32, i32
  }
  func.func @transform_5(%arg0: i32, %arg1: i32) -> (i32, i32) {
    %c0_i32 = arith.constant 0 : i32
    %c0_i32_0 = arith.constant 0 : i32
    return %arg0, %c0_i32 : i32, i32
  }
}

</mosaic_0001>

<llo_original>
// kernel: tpu_custom_call.1
$region0: #{tpu_custom_call.1}
  #allocation0 [shape = 'u32[]', space=smem, size = 0x4, offset = 0x4, fixed_abs, tag = 'smem constant byte address 0x4 - core index']
  #allocation1 [shape = 'u32[144,128]{1,0:T(1,128)}', space=vmem, size = 0x12000, scoped, tag = 'internal scratch']
  #allocation2 [shape = 'f32[128,128]{1,0:T(8,128)}', space=vmem, size = 0x10000, scoped, tag = 'scratch operand']
  %s0 = inlined_call_operand.hbm [shape: bf16[128,128], index: 0, kind: input, shape index: {}]
  %s1 = inlined_call_operand.hbm [shape: bf16[128,128], index: 1, kind: input, shape index: {}]
  %s2 = inlined_call_operand.hbm [shape: bf16[128,128], index: 2, kind: input, shape index: {}]
  %s3 = inlined_call_operand.hbm [shape: bf16[256,128], index: 3, kind: input, shape index: {}]
  %s4 = inlined_call_operand.vmem [shape: f32[1,128], index: 4, kind: input, shape index: {}]
  %s5 = inlined_call_operand.hbm [shape: bf16[128,128], index: 5, kind: output, shape index: {}]
  %s6 = sld [smem:[#allocation0]]
  $region54: #{tpu_custom_call.1} parent=0
    _
  %s8 = ssub.s32 1, %s6
  %s9 = scalar_select 0, %s8, %s6
  $region1: #{tpu_custom_call.1} parent=0
    #allocation3 [shape = 'u8[32768]{0}', space=vmem, size = 0x8000, scoped, tag = 'input window, operand 0, single buffered']
    #allocation4 [shape = 's32[1]{0}', space=sflag, size = 0x4, scoped, tag = 'scoped memory for tpu_custom_call.1']
    #allocation5 [shape = 's32[1]{0}', space=sflag, size = 0x4, scoped, tag = 'scoped memory for tpu_custom_call.1']
    #allocation6 [shape = 'u8[32768]{0}', space=vmem, size = 0x8000, scoped, tag = 'input window, operand 1, single buffered']
    #allocation7 [shape = 's32[1]{0}', space=sflag, size = 0x4, scoped, tag = 'scoped memory for tpu_custom_call.1']
    #allocation8 [shape = 'u8[32768]{0}', space=vmem, size = 0x8000, scoped, tag = 'input window, operand 2, single buffered']
    #allocation9 [shape = 'u8[65536]{0}', space=vmem, size = 0x10000, scoped, tag = 'input window, operand 3, single buffered']
    #allocation10 [shape = 's32[1]{0}', space=sflag, size = 0x4, scoped, tag = 'scoped memory for tpu_custom_call.1']
    #allocation11 [shape = 'u8[32768]{0}', space=vmem, size = 0x8000, scoped, tag = 'output window, operand 0, single buffered']
    %10 = vsyncpa [#allocation4], 0
    %11 = vsyncpa [#allocation7], 0
    %12 = vsyncpa [#allocation10], 0
    %13 = vsyncpa [#allocation5], 0
    // Predicated region
    $region2: #{tpu_custom_call.1} parent=1 // pred_check
      _
    $region3: #{tpu_custom_call.1} parent=1 // pred_check_branch
      %15 = sbr.rel (0) target = $region5
    $region4: #{tpu_custom_call.1} parent=1 // pred_region
      %s17 = ssub.s32 1024, 1024
      %18 = vsyncadd [#allocation4], %s17
      %s19 = sshll.u32 [#allocation3], 4
      %s20 = int_to_ptr.vmem [resolvable:$true] %s19
      %25 = dma.hbm_to_vmem [thread:$0]  %s0, 1024, %s20, [#allocation4], 64, 64, 4
    $region5: #{tpu_custom_call.1} parent=1 // pred_fallthru
      _
    // Predicated region
    $region6: #{tpu_custom_call.1} parent=1 // pred_check
      _
    $region7: #{tpu_custom_call.1} parent=1 // pred_check_branch
      %27 = sbr.rel (0) target = $region9
    $region8: #{tpu_custom_call.1} parent=1 // pred_region
      %s29 = ssub.s32 1024, 1024
      %30 = vsyncadd [#allocation7], %s29
      %s31 = sshll.u32 [#allocation6], 4
      %s32 = int_to_ptr.vmem [resolvable:$true] %s31
      %37 = dma.hbm_to_vmem [thread:$0]  %s1, 1024, %s32, [#allocation7], 64, 64, 4
    $region9: #{tpu_custom_call.1} parent=1 // pred_fallthru
      _
    // Predicated region
    $region10: #{tpu_custom_call.1} parent=1 // pred_check
      _
    $region11: #{tpu_custom_call.1} parent=1 // pred_check_branch
      %39 = sbr.rel (0) target = $region13
    $region12: #{tpu_custom_call.1} parent=1 // pred_region
      %s41 = ssub.s32 1024, 1024
      %42 = vsyncadd [#allocation7], %s41
      %s43 = sshll.u32 [#allocation8], 4
      %s44 = int_to_ptr.vmem [resolvable:$true] %s43
      %49 = dma.hbm_to_vmem [thread:$0]  %s2, 1024, %s44, [#allocation7], 64, 64, 4
    $region13: #{tpu_custom_call.1} parent=1 // pred_fallthru
      _
    // Predicated region
    $region14: #{tpu_custom_call.1} parent=1 // pred_check
      _
    $region15: #{tpu_custom_call.1} parent=1 // pred_check_branch
      %51 = sbr.rel (0) target = $region17
    $region16: #{tpu_custom_call.1} parent=1 // pred_region
      %s53 = ssub.s32 2048, 2048
      %54 = vsyncadd [#allocation10], %s53
      %s55 = sshll.u32 [#allocation9], 4
      %s56 = int_to_ptr.vmem [resolvable:$true] %s55
      %61 = dma.hbm_to_vmem [thread:$0]  %s3, 2048, %s56, [#allocation10], 64, 64, 4
    $region17: #{tpu_custom_call.1} parent=1 // pred_fallthru
      _
    // Predicated region
    $region18: #{tpu_custom_call.1} parent=1 // pred_check
      _
    $region19: #{tpu_custom_call.1} parent=1 // pred_check_branch
      %63 = sbr.rel (0) target = $region21
    $region20: #{tpu_custom_call.1} parent=1 // pred_region
      _
    $region21: #{tpu_custom_call.1} parent=1 // pred_fallthru
      _
    // Predicated region
    $region22: #{tpu_custom_call.1} parent=1 // pred_check
      _
    $region23: #{tpu_custom_call.1} parent=1 // pred_check_branch
      %65 = sbr.rel (0) target = $region25
    $region24: #{tpu_custom_call.1} parent=1 // pred_region
      %66 = dma.done [#allocation4], 1024
    $region25: #{tpu_custom_call.1} parent=1 // pred_fallthru
      _
    // Predicated region
    $region26: #{tpu_custom_call.1} parent=1 // pred_check
      _
    $region27: #{tpu_custom_call.1} parent=1 // pred_check_branch
      %68 = sbr.rel (0) target = $region29
    $region28: #{tpu_custom_call.1} parent=1 // pred_region
      %69 = dma.done [#allocation7], 1024
    $region29: #{tpu_custom_call.1} parent=1 // pred_fallthru
      _
    // Predicated region
    $region30: #{tpu_custom_call.1} parent=1 // pred_check
      _
    $region31: #{tpu_custom_call.1} parent=1 // pred_check_branch
      %71 = sbr.rel (0) target = $region33
    $region32: #{tpu_custom_call.1} parent=1 // pred_region
      %72 = dma.done [#allocation7], 1024
    $region33: #{tpu_custom_call.1} parent=1 // pred_fallthru
      _
    // Predicated region
    $region34: #{tpu_custom_call.1} parent=1 // pred_check
      _
    $region35: #{tpu_custom_call.1} parent=1 // pred_check_branch
      %74 = sbr.rel (0) target = $region37
    $region36: #{tpu_custom_call.1} parent=1 // pred_region
      %75 = dma.done [#allocation10], 2048
    $region37: #{tpu_custom_call.1} parent=1 // pred_fallthru
      _
    %p77 = scmp.eq.s32.totalorder 0, 0
    // Predicated region
    $region38: #{tpu_custom_call.1} parent=1 // pred_check
      %p78 = pneg %p77
    $region39: #{tpu_custom_call.1} parent=1 // pred_check_branch
      %80 = sbr.rel (%p78) target = $region41
    $region40: #{tpu_custom_call.1} parent=1 // pred_region
      %81 = vst [vmem:[#allocation2] sm:$0xff] 0.0
      %82 = vst [vmem:[#allocation2 + $0x8] sm:$0xff] 0.0
      %83 = vst [vmem:[#allocation2 + $0x10] sm:$0xff] 0.0
      %84 = vst [vmem:[#allocation2 + $0x18] sm:$0xff] 0.0
      %85 = vst [vmem:[#allocation2 + $0x20] sm:$0xff] 0.0
      %86 = vst [vmem:[#allocation2 + $0x28] sm:$0xff] 0.0
      %87 = vst [vmem:[#allocation2 + $0x30] sm:$0xff] 0.0
      %88 = vst [vmem:[#allocation2 + $0x38] sm:$0xff] 0.0
      %89 = vst [vmem:[#allocation2 + $0x40] sm:$0xff] 0.0
      %90 = vst [vmem:[#allocation2 + $0x48] sm:$0xff] 0.0
      %91 = vst [vmem:[#allocation2 + $0x50] sm:$0xff] 0.0
      %92 = vst [vmem:[#allocation2 + $0x58] sm:$0xff] 0.0
      %93 = vst [vmem:[#allocation2 + $0x60] sm:$0xff] 0.0
      %94 = vst [vmem:[#allocation2 + $0x68] sm:$0xff] 0.0
      %95 = vst [vmem:[#allocation2 + $0x70] sm:$0xff] 0.0
      %96 = vst [vmem:[#allocation2 + $0x78] sm:$0xff] 0.0
    $region41: #{tpu_custom_call.1} parent=1 // pred_fallthru
      _
    %v97 = vld [vmem:[#allocation2] sm:$0xff]
    %v98 = vld [vmem:[#allocation2 + $0x8] sm:$0xff]
    %v99 = vld [vmem:[#allocation2 + $0x10] sm:$0xff]
    %v100 = vld [vmem:[#allocation2 + $0x18] sm:$0xff]
    %v101 = vld [vmem:[#allocation2 + $0x20] sm:$0xff]
    %v102 = vld [vmem:[#allocation2 + $0x28] sm:$0xff]
    %v103 = vld [vmem:[#allocation2 + $0x30] sm:$0xff]
    %v104 = vld [vmem:[#allocation2 + $0x38] sm:$0xff]
    %v105 = vld [vmem:[#allocation2 + $0x40] sm:$0xff]
    %v106 = vld [vmem:[#allocation2 + $0x48] sm:$0xff]
    %v107 = vld [vmem:[#allocation2 + $0x50] sm:$0xff]
    %v108 = vld [vmem:[#allocation2 + $0x58] sm:$0xff]
    %v109 = vld [vmem:[#allocation2 + $0x60] sm:$0xff]
    %v110 = vld [vmem:[#allocation2 + $0x68] sm:$0xff]
    %v111 = vld [vmem:[#allocation2 + $0x70] sm:$0xff]
    %v112 = vld [vmem:[#allocation2 + $0x78] sm:$0xff]
    %v113 = vld [vmem:[#allocation3] sm:$0xf]
    %v114 = vld [vmem:[#allocation3 + $0x4] sm:$0xf]
    %v115 = vld [vmem:[#allocation3 + $0x8] sm:$0xf]
    %v116 = vld [vmem:[#allocation3 + $0xc] sm:$0xf]
    %v117 = vld [vmem:[#allocation3 + $0x10] sm:$0xf]
    %v118 = vld [vmem:[#allocation3 + $0x14] sm:$0xf]
    %v119 = vld [vmem:[#allocation3 + $0x18] sm:$0xf]
    %v120 = vld [vmem:[#allocation3 + $0x1c] sm:$0xf]
    %v121 = vld [vmem:[#allocation3 + $0x20] sm:$0xf]
    %v122 = vld [vmem:[#allocation3 + $0x24] sm:$0xf]
    %v123 = vld [vmem:[#allocation3 + $0x28] sm:$0xf]
    %v124 = vld [vmem:[#allocation3 + $0x2c] sm:$0xf]
    %v125 = vld [vmem:[#allocation3 + $0x30] sm:$0xf]
    %v126 = vld [vmem:[#allocation3 + $0x34] sm:$0xf]
    %v127 = vld [vmem:[#allocation3 + $0x38] sm:$0xf]
    %v128 = vld [vmem:[#allocation3 + $0x3c] sm:$0xf]
    %v129 = vld [vmem:[#allocation6] sm:$0xf]
    %v130 = vld [vmem:[#allocation6 + $0x4] sm:$0xf]
    %v131 = vld [vmem:[#allocation6 + $0x8] sm:$0xf]
    %v132 = vld [vmem:[#allocation6 + $0xc] sm:$0xf]
    %v133 = vld [vmem:[#allocation6 + $0x10] sm:$0xf]
    %v134 = vld [vmem:[#allocation6 + $0x14] sm:$0xf]
    %v135 = vld [vmem:[#allocation6 + $0x18] sm:$0xf]
    %v136 = vld [vmem:[#allocation6 + $0x1c] sm:$0xf]
    %v137 = vld [vmem:[#allocation6 + $0x20] sm:$0xf]
    %v138 = vld [vmem:[#allocation6 + $0x24] sm:$0xf]
    %v139 = vld [vmem:[#allocation6 + $0x28] sm:$0xf]
    %v140 = vld [vmem:[#allocation6 + $0x2c] sm:$0xf]
    %v141 = vld [vmem:[#allocation6 + $0x30] sm:$0xf]
    %v142 = vld [vmem:[#allocation6 + $0x34] sm:$0xf]
    %v143 = vld [vmem:[#allocation6 + $0x38] sm:$0xf]
    %v144 = vld [vmem:[#allocation6 + $0x3c] sm:$0xf]
    %v161 = vunpack.c.l.b16 %v113
    %v162 = vunpack.c.l.b16 %v114
    %v163 = vunpack.c.l.b16 %v115
    %v164 = vunpack.c.l.b16 %v116
    %v165 = vunpack.c.l.b16 %v117
    %v166 = vunpack.c.l.b16 %v118
    %v167 = vunpack.c.l.b16 %v119
    %v168 = vunpack.c.l.b16 %v120
    %v169 = vunpack.c.l.b16 %v121
    %v170 = vunpack.c.l.b16 %v122
    %v171 = vunpack.c.l.b16 %v123
    %v172 = vunpack.c.l.b16 %v124
    %v173 = vunpack.c.l.b16 %v125
    %v174 = vunpack.c.l.b16 %v126
    %v175 = vunpack.c.l.b16 %v127
    %v176 = vunpack.c.l.b16 %v128
    %v177 = vpack.c.b16 %v162, %v161
    %v178 = vpack.c.b16 %v164, %v163
    %v179 = vpack.c.b16 %v166, %v165
    %v180 = vpack.c.b16 %v168, %v167
    %v181 = vpack.c.b16 %v170, %v169
    %v182 = vpack.c.b16 %v172, %v171
    %v183 = vpack.c.b16 %v174, %v173
    %v184 = vpack.c.b16 %v176, %v175
    %v209 = vunpack.c.l.b16 %v129
    %v210 = vunpack.c.l.b16 %v130
    %v211 = vunpack.c.l.b16 %v131
    %v212 = vunpack.c.l.b16 %v132
    %v213 = vunpack.c.l.b16 %v133
    %v214 = vunpack.c.l.b16 %v134
    %v215 = vunpack.c.l.b16 %v135
    %v216 = vunpack.c.l.b16 %v136
    %v217 = vunpack.c.l.b16 %v137
    %v218 = vunpack.c.l.b16 %v138
    %v219 = vunpack.c.l.b16 %v139
    %v220 = vunpack.c.l.b16 %v140
    %v221 = vunpack.c.l.b16 %v141
    %v222 = vunpack.c.l.b16 %v142
    %v223 = vunpack.c.l.b16 %v143
    %v224 = vunpack.c.l.b16 %v144
    %v225 = vpack.c.b16 %v210, %v209
    %v226 = vpack.c.b16 %v212, %v211
    %v227 = vpack.c.b16 %v214, %v213
    %v228 = vpack.c.b16 %v216, %v215
    %v229 = vpack.c.b16 %v218, %v217
    %v230 = vpack.c.b16 %v220, %v219
    %v231 = vpack.c.b16 %v222, %v221
    %v232 = vpack.c.b16 %v224, %v223
    %241 = vmatprep.subr.bf16.mxu0 0
    %242 = vmatpush1.bf16.msra.mxu0 %v225
    %243 = vmatprep.subr.bf16.mxu0 0
    %244 = vmatpush1.bf16.msra.mxu0 %v226
    %245 = vmatprep.subr.bf16.mxu0 0
    %246 = vmatpush1.bf16.msra.mxu0 %v227
    %247 = vmatprep.subr.bf16.mxu0 0
    %248 = vmatpush1.bf16.msra.mxu0 %v228
    %249 = vmatprep.subr.bf16.mxu0 0
    %250 = vmatpush1.bf16.msra.mxu0 %v229
    %251 = vmatprep.subr.bf16.mxu0 0
    %252 = vmatpush1.bf16.msra.mxu0 %v230
    %253 = vmatprep.subr.bf16.mxu0 0
    %254 = vmatpush1.bf16.msra.mxu0 %v231
    %255 = vmatprep.subr.bf16.mxu0 0
    %256 = vmatpush1.bf16.msra.mxu0 %v232
    %257 = vmatprep.subr.bf16.mxu0 0
    %258 = vmatpush1.bf16.msra.mxu0 0
    %259 = vmatprep.subr.bf16.mxu0 0
    %260 = vmatpush1.bf16.msra.mxu0 0
    %261 = vmatprep.subr.bf16.mxu0 0
    %262 = vmatpush1.bf16.msra.mxu0 0
    %263 = vmatprep.subr.bf16.mxu0 0
    %264 = vmatpush1.bf16.msra.mxu0 0
    %265 = vmatprep.subr.bf16.mxu0 0
    %266 = vmatpush1.bf16.msra.mxu0 0
    %267 = vmatprep.subr.bf16.mxu0 0
    %268 = vmatpush1.bf16.msra.mxu0 0
    %269 = vmatprep.subr.bf16.mxu0 0
    %270 = vmatpush1.bf16.msra.mxu0 0
    %271 = vmatprep.subr.bf16.mxu0 0
    %272 = vmatpush1.bf16.msra.mxu0 0
    %273 = vmatprep.mubr.bf16.mxu0 0
    %274 = vmatmul.mubr.bf16.gmra.mrb[0].mxu0 %v177
    %v275 = vpop.f32.mrb[0].mxu0
    %v276 = vadd.f32 0.0, %v275
    %v277 = vpop.f32.mrb[0].mxu0
    %v278 = vpop.f32.mrb[0].mxu0
    %v279 = vadd.f32 0.0, %v278
    %v280 = vpop.f32.mrb[0].mxu0
    %281 = vmatprep.mubr.bf16.mxu0 0
    %282 = vmatmul.mubr.bf16.gmra.mrb[0].mxu0 %v178
    %v283 = vpop.f32.mrb[0].mxu0
    %v284 = vadd.f32 0.0, %v283
    %v285 = vpop.f32.mrb[0].mxu0
    %v286 = vpop.f32.mrb[0].mxu0
    %v287 = vadd.f32 0.0, %v286
    %v288 = vpop.f32.mrb[0].mxu0
    %289 = vmatprep.mubr.bf16.mxu0 0
    %290 = vmatmul.mubr.bf16.gmra.mrb[0].mxu0 %v179
    %v291 = vpop.f32.mrb[0].mxu0
    %v292 = vadd.f32 0.0, %v291
    %v293 = vpop.f32.mrb[0].mxu0
    %v294 = vpop.f32.mrb[0].mxu0
    %v295 = vadd.f32 0.0, %v294
    %v296 = vpop.f32.mrb[0].mxu0
    %297 = vmatprep.mubr.bf16.mxu0 0
    %298 = vmatmul.mubr.bf16.gmra.mrb[0].mxu0 %v180
    %v299 = vpop.f32.mrb[0].mxu0
    %v300 = vadd.f32 0.0, %v299
    %v301 = vpop.f32.mrb[0].mxu0
    %v302 = vpop.f32.mrb[0].mxu0
    %v303 = vadd.f32 0.0, %v302
    %v304 = vpop.f32.mrb[0].mxu0
    %305 = vmatprep.mubr.bf16.mxu0 0
    %306 = vmatmul.mubr.bf16.gmra.mrb[0].mxu0 %v181
    %v307 = vpop.f32.mrb[0].mxu0
    %v308 = vadd.f32 0.0, %v307
    %v309 = vpop.f32.mrb[0].mxu0
    %v310 = vpop.f32.mrb[0].mxu0
    %v311 = vadd.f32 0.0, %v310
    %v312 = vpop.f32.mrb[0].mxu0
    %313 = vmatprep.mubr.bf16.mxu0 0
    %314 = vmatmul.mubr.bf16.gmra.mrb[0].mxu0 %v182
    %v315 = vpop.f32.mrb[0].mxu0
    %v316 = vadd.f32 0.0, %v315
    %v317 = vpop.f32.mrb[0].mxu0
    %v318 = vpop.f32.mrb[0].mxu0
    %v319 = vadd.f32 0.0, %v318
    %v320 = vpop.f32.mrb[0].mxu0
    %321 = vmatprep.mubr.bf16.mxu0 0
    %322 = vmatmul.mubr.bf16.gmra.mrb[0].mxu0 %v183
    %v323 = vpop.f32.mrb[0].mxu0
    %v324 = vadd.f32 0.0, %v323
    %v325 = vpop.f32.mrb[0].mxu0
    %v326 = vpop.f32.mrb[0].mxu0
    %v327 = vadd.f32 0.0, %v326
    %v328 = vpop.f32.mrb[0].mxu0
    %329 = vmatprep.mubr.bf16.mxu0 0
    %330 = vmatmul.mubr.bf16.gmra.mrb[0].mxu0 %v184
    %v331 = vpop.f32.mrb[0].mxu0
    %v332 = vadd.f32 0.0, %v331
    %v333 = vpop.f32.mrb[0].mxu0
    %v334 = vpop.f32.mrb[0].mxu0
    %v335 = vadd.f32 0.0, %v334
    %v336 = vpop.f32.mrb[0].mxu0
    %337 = vdwg.mxu0
    %v338 = vadd.f32 %v97, %v276
    %v339 = vadd.f32 %v98, %v279
    %v340 = vadd.f32 %v99, %v284
    %v341 = vadd.f32 %v100, %v287
    %v342 = vadd.f32 %v101, %v292
    %v343 = vadd.f32 %v102, %v295
    %v344 = vadd.f32 %v103, %v300
    %v345 = vadd.f32 %v104, %v303
    %v346 = vadd.f32 %v105, %v308
    %v347 = vadd.f32 %v106, %v311
    %v348 = vadd.f32 %v107, %v316
    %v349 = vadd.f32 %v108, %v319
    %v350 = vadd.f32 %v109, %v324
    %v351 = vadd.f32 %v110, %v327
    %v352 = vadd.f32 %v111, %v332
    %v353 = vadd.f32 %v112, %v335
    %354 = vst [vmem:[#allocation2] sm:$0xff] %v338
    %355 = vst [vmem:[#allocation2 + $0x8] sm:$0xff] %v339
    %356 = vst [vmem:[#allocation2 + $0x10] sm:$0xff] %v340
    %357 = vst [vmem:[#allocation2 + $0x18] sm:$0xff] %v341
    %358 = vst [vmem:[#allocation2 + $0x20] sm:$0xff] %v342
    %359 = vst [vmem:[#allocation2 + $0x28] sm:$0xff] %v343
    %360 = vst [vmem:[#allocation2 + $0x30] sm:$0xff] %v344
    %361 = vst [vmem:[#allocation2 + $0x38] sm:$0xff] %v345
    %362 = vst [vmem:[#allocation2 + $0x40] sm:$0xff] %v346
    %363 = vst [vmem:[#allocation2 + $0x48] sm:$0xff] %v347
    %364 = vst [vmem:[#allocation2 + $0x50] sm:$0xff] %v348
    %365 = vst [vmem:[#allocation2 + $0x58] sm:$0xff] %v349
    %366 = vst [vmem:[#allocation2 + $0x60] sm:$0xff] %v350
    %367 = vst [vmem:[#allocation2 + $0x68] sm:$0xff] %v351
    %368 = vst [vmem:[#allocation2 + $0x70] sm:$0xff] %v352
    %369 = vst [vmem:[#allocation2 + $0x78] sm:$0xff] %v353
    // Predicated region
    $region42: #{tpu_custom_call.1} parent=1 // pred_check
      %p370 = pneg %p77
    $region43: #{tpu_custom_call.1} parent=1 // pred_check_branch
      %372 = sbr.rel (%p370) target = $region45
    $region44: #{tpu_custom_call.1} parent=1 // pred_region
      %v373 = vld [vmem:[#allocation2] sm:$0xff]
      %v374 = vld [vmem:[#allocation2 + $0x8] sm:$0xff]
      %v375 = vld [vmem:[#allocation2 + $0x10] sm:$0xff]
      %v376 = vld [vmem:[#allocation2 + $0x18] sm:$0xff]
      %v377 = vld [vmem:[#allocation2 + $0x20] sm:$0xff]
      %v378 = vld [vmem:[#allocation2 + $0x28] sm:$0xff]
      %v379 = vld [vmem:[#allocation2 + $0x30] sm:$0xff]
      %v380 = vld [vmem:[#allocation2 + $0x38] sm:$0xff]
      %v381 = vld [vmem:[#allocation2 + $0x40] sm:$0xff]
      %v382 = vld [vmem:[#allocation2 + $0x48] sm:$0xff]
      %v383 = vld [vmem:[#allocation2 + $0x50] sm:$0xff]
      %v384 = vld [vmem:[#allocation2 + $0x58] sm:$0xff]
      %v385 = vld [vmem:[#allocation2 + $0x60] sm:$0xff]
      %v386 = vld [vmem:[#allocation2 + $0x68] sm:$0xff]
      %v387 = vld [vmem:[#allocation2 + $0x70] sm:$0xff]
      %v388 = vld [vmem:[#allocation2 + $0x78] sm:$0xff]
      %v389 = vpack.c.bf16 %v374, %v373
      %v390 = vpack.c.bf16 %v376, %v375
      %v391 = vpack.c.bf16 %v378, %v377
      %v392 = vpack.c.bf16 %v380, %v379
      %v393 = vpack.c.bf16 %v382, %v381
      %v394 = vpack.c.bf16 %v384, %v383
      %v395 = vpack.c.bf16 %v386, %v385
      %v396 = vpack.c.bf16 %v388, %v387
      %v397 = vld [vmem:[#allocation8] sm:$0xf]
      %v398 = vld [vmem:[#allocation8 + $0x4] sm:$0xf]
      %v399 = vld [vmem:[#allocation8 + $0x8] sm:$0xf]
      %v400 = vld [vmem:[#allocation8 + $0xc] sm:$0xf]
      %v401 = vld [vmem:[#allocation8 + $0x10] sm:$0xf]
      %v402 = vld [vmem:[#allocation8 + $0x14] sm:$0xf]
      %v403 = vld [vmem:[#allocation8 + $0x18] sm:$0xf]
      %v404 = vld [vmem:[#allocation8 + $0x1c] sm:$0xf]
      %v405 = vld [vmem:[#allocation8 + $0x20] sm:$0xf]
      %v406 = vld [vmem:[#allocation8 + $0x24] sm:$0xf]
      %v407 = vld [vmem:[#allocation8 + $0x28] sm:$0xf]
      %v408 = vld [vmem:[#allocation8 + $0x2c] sm:$0xf]
      %v409 = vld [vmem:[#allocation8 + $0x30] sm:$0xf]
      %v410 = vld [vmem:[#allocation8 + $0x34] sm:$0xf]
      %v411 = vld [vmem:[#allocation8 + $0x38] sm:$0xf]
      %v412 = vld [vmem:[#allocation8 + $0x3c] sm:$0xf]
      %v429 = vunpack.c.l.b16 %v397
      %v430 = vunpack.c.l.b16 %v398
      %v431 = vunpack.c.l.b16 %v399
      %v432 = vunpack.c.l.b16 %v400
      %v433 = vunpack.c.l.b16 %v401
      %v434 = vunpack.c.l.b16 %v402
      %v435 = vunpack.c.l.b16 %v403
      %v436 = vunpack.c.l.b16 %v404
      %v437 = vunpack.c.l.b16 %v405
      %v438 = vunpack.c.l.b16 %v406
      %v439 = vunpack.c.l.b16 %v407
      %v440 = vunpack.c.l.b16 %v408
      %v441 = vunpack.c.l.b16 %v409
      %v442 = vunpack.c.l.b16 %v410
      %v443 = vunpack.c.l.b16 %v411
      %v444 = vunpack.c.l.b16 %v412
      %v445 = vpack.c.b16 %v430, %v429
      %v446 = vpack.c.b16 %v432, %v431
      %v447 = vpack.c.b16 %v434, %v433
      %v448 = vpack.c.b16 %v436, %v435
      %v449 = vpack.c.b16 %v438, %v437
      %v450 = vpack.c.b16 %v440, %v439
      %v451 = vpack.c.b16 %v442, %v441
      %v452 = vpack.c.b16 %v444, %v443
      %v461 = vld [vmem:[#allocation9] sm:$0xf]
      %v462 = vld [vmem:[#allocation9 + $0x4] sm:$0xf]
      %v463 = vld [vmem:[#allocation9 + $0x8] sm:$0xf]
      %v464 = vld [vmem:[#allocation9 + $0xc] sm:$0xf]
      %v465 = vld [vmem:[#allocation9 + $0x10] sm:$0xf]
      %v466 = vld [vmem:[#allocation9 + $0x14] sm:$0xf]
      %v467 = vld [vmem:[#allocation9 + $0x18] sm:$0xf]
      %v468 = vld [vmem:[#allocation9 + $0x1c] sm:$0xf]
      %v469 = vld [vmem:[#allocation9 + $0x20] sm:$0xf]
      %v470 = vld [vmem:[#allocation9 + $0x24] sm:$0xf]
      %v471 = vld [vmem:[#allocation9 + $0x28] sm:$0xf]
      %v472 = vld [vmem:[#allocation9 + $0x2c] sm:$0xf]
      %v473 = vld [vmem:[#allocation9 + $0x30] sm:$0xf]
      %v474 = vld [vmem:[#allocation9 + $0x34] sm:$0xf]
      %v475 = vld [vmem:[#allocation9 + $0x38] sm:$0xf]
      %v476 = vld [vmem:[#allocation9 + $0x3c] sm:$0xf]
      %v477 = vld [vmem:[#allocation9 + $0x40] sm:$0xf]
      %v478 = vld [vmem:[#allocation9 + $0x44] sm:$0xf]
      %v479 = vld [vmem:[#allocation9 + $0x48] sm:$0xf]
      %v480 = vld [vmem:[#allocation9 + $0x4c] sm:$0xf]
      %v481 = vld [vmem:[#allocation9 + $0x50] sm:$0xf]
      %v482 = vld [vmem:[#allocation9 + $0x54] sm:$0xf]
      %v483 = vld [vmem:[#allocation9 + $0x58] sm:$0xf]
      %v484 = vld [vmem:[#allocation9 + $0x5c] sm:$0xf]
      %v485 = vld [vmem:[#allocation9 + $0x60] sm:$0xf]
      %v486 = vld [vmem:[#allocation9 + $0x64] sm:$0xf]
      %v487 = vld [vmem:[#allocation9 + $0x68] sm:$0xf]
      %v488 = vld [vmem:[#allocation9 + $0x6c] sm:$0xf]
      %v489 = vld [vmem:[#allocation9 + $0x70] sm:$0xf]
      %v490 = vld [vmem:[#allocation9 + $0x74] sm:$0xf]
      %v491 = vld [vmem:[#allocation9 + $0x78] sm:$0xf]
      %v492 = vld [vmem:[#allocation9 + $0x7c] sm:$0xf]
      %v493 = vld [vmem:[%s4] sm:$0x1]
      %v495 = vlaneseq
      %v496 = vshrl.u32 %v495, 7
      %v497 = vsub.s32 0, %v496
      %v498 = vrot.slane %v493, %v497
      %v532 = vunpack.c.l.b16 %v461
      %v533 = vunpack.c.l.b16 %v462
      %v534 = vunpack.c.l.b16 %v463
      %v535 = vunpack.c.l.b16 %v464
      %v536 = vunpack.c.l.b16 %v465
      %v537 = vunpack.c.l.b16 %v466
      %v538 = vunpack.c.l.b16 %v467
      %v539 = vunpack.c.l.b16 %v468
      %v540 = vunpack.c.l.b16 %v469
      %v541 = vunpack.c.l.b16 %v470
      %v542 = vunpack.c.l.b16 %v471
      %v543 = vunpack.c.l.b16 %v472
      %v544 = vunpack.c.l.b16 %v473
      %v545 = vunpack.c.l.b16 %v474
      %v546 = vunpack.c.l.b16 %v475
      %v547 = vunpack.c.l.b16 %v476
      %v548 = vunpack.c.l.b16 %v477
      %v549 = vunpack.c.l.b16 %v478
      %v550 = vunpack.c.l.b16 %v479
      %v551 = vunpack.c.l.b16 %v480
      %v552 = vunpack.c.l.b16 %v481
      %v553 = vunpack.c.l.b16 %v482
      %v554 = vunpack.c.l.b16 %v483
      %v555 = vunpack.c.l.b16 %v484
      %v556 = vunpack.c.l.b16 %v485
      %v557 = vunpack.c.l.b16 %v486
      %v558 = vunpack.c.l.b16 %v487
      %v559 = vunpack.c.l.b16 %v488
      %v560 = vunpack.c.l.b16 %v489
      %v561 = vunpack.c.l.b16 %v490
      %v562 = vunpack.c.l.b16 %v491
      %v563 = vunpack.c.l.b16 %v492
      %v564 = vpack.c.b16 %v533, %v532
      %v565 = vpack.c.b16 %v535, %v534
      %v566 = vpack.c.b16 %v537, %v536
      %v567 = vpack.c.b16 %v539, %v538
      %v568 = vpack.c.b16 %v541, %v540
      %v569 = vpack.c.b16 %v543, %v542
      %v570 = vpack.c.b16 %v545, %v544
      %v571 = vpack.c.b16 %v547, %v546
      %v572 = vpack.c.b16 %v549, %v548
      %v573 = vpack.c.b16 %v551, %v550
      %v574 = vpack.c.b16 %v553, %v552
      %v575 = vpack.c.b16 %v555, %v554
      %v576 = vpack.c.b16 %v557, %v556
      %v577 = vpack.c.b16 %v559, %v558
      %v578 = vpack.c.b16 %v561, %v560
      %v579 = vpack.c.b16 %v563, %v562
      %596 = vmatprep.subr.bf16.mxu0 0
      %597 = vmatpush1.bf16.msra.mxu0 %v564
      %598 = vmatprep.subr.bf16.mxu0 0
      %599 = vmatpush1.bf16.msra.mxu0 %v565
      %600 = vmatprep.subr.bf16.mxu0 0
      %601 = vmatpush1.bf16.msra.mxu0 %v566
      %602 = vmatprep.subr.bf16.mxu0 0
      %603 = vmatpush1.bf16.msra.mxu0 %v567
      %604 = vmatprep.subr.bf16.mxu0 0
      %605 = vmatpush1.bf16.msra.mxu0 %v568
      %606 = vmatprep.subr.bf16.mxu0 0
      %607 = vmatpush1.bf16.msra.mxu0 %v569
      %608 = vmatprep.subr.bf16.mxu0 0
      %609 = vmatpush1.bf16.msra.mxu0 %v570
      %610 = vmatprep.subr.bf16.mxu0 0
      %611 = vmatpush1.bf16.msra.mxu0 %v571
      %612 = vmatprep.subr.bf16.mxu0 0
      %613 = vmatpush1.bf16.msra.mxu0 %v572
      %614 = vmatprep.subr.bf16.mxu0 0
      %615 = vmatpush1.bf16.msra.mxu0 %v573
      %616 = vmatprep.subr.bf16.mxu0 0
      %617 = vmatpush1.bf16.msra.mxu0 %v574
      %618 = vmatprep.subr.bf16.mxu0 0
      %619 = vmatpush1.bf16.msra.mxu0 %v575
      %620 = vmatprep.subr.bf16.mxu0 0
      %621 = vmatpush1.bf16.msra.mxu0 %v576
      %622 = vmatprep.subr.bf16.mxu0 0
      %623 = vmatpush1.bf16.msra.mxu0 %v577
      %624 = vmatprep.subr.bf16.mxu0 0
      %625 = vmatpush1.bf16.msra.mxu0 %v578
      %626 = vmatprep.subr.bf16.mxu0 0
      %627 = vmatpush1.bf16.msra.mxu0 %v579
      %628 = vmatprep.mubr.bf16.mxu0 %v445
      %629 = vmatmul.mubr.bf16.gmra.mrb[0].mxu0 %v389
      %v630 = vpop.f32.mrb[0].mxu0
      %v631 = vadd.f32 %v498, %v630
      %v632 = vpop.f32.mrb[0].mxu0
      %v633 = vpop.f32.mrb[0].mxu0
      %v634 = vadd.f32 %v498, %v633
      %v635 = vpop.f32.mrb[0].mxu0
      %636 = vmatprep.mubr.bf16.mxu0 %v446
      %637 = vmatmul.mubr.bf16.gmra.mrb[0].mxu0 %v390
      %v638 = vpop.f32.mrb[0].mxu0
      %v639 = vadd.f32 %v498, %v638
      %v640 = vpop.f32.mrb[0].mxu0
      %v641 = vpop.f32.mrb[0].mxu0
      %v642 = vadd.f32 %v498, %v641
      %v643 = vpop.f32.mrb[0].mxu0
      %644 = vmatprep.mubr.bf16.mxu0 %v447
      %645 = vmatmul.mubr.bf16.gmra.mrb[0].mxu0 %v391
      %v646 = vpop.f32.mrb[0].mxu0
      %v647 = vadd.f32 %v498, %v646
      %v648 = vpop.f32.mrb[0].mxu0
      %v649 = vpop.f32.mrb[0].mxu0
      %v650 = vadd.f32 %v498, %v649
      %v651 = vpop.f32.mrb[0].mxu0
      %652 = vmatprep.mubr.bf16.mxu0 %v448
      %653 = vmatmul.mubr.bf16.gmra.mrb[0].mxu0 %v392
      %v654 = vpop.f32.mrb[0].mxu0
      %v655 = vadd.f32 %v498, %v654
      %v656 = vpop.f32.mrb[0].mxu0
      %v657 = vpop.f32.mrb[0].mxu0
      %v658 = vadd.f32 %v498, %v657
      %v659 = vpop.f32.mrb[0].mxu0
      %660 = vmatprep.mubr.bf16.mxu0 %v449
      %661 = vmatmul.mubr.bf16.gmra.mrb[0].mxu0 %v393
      %v662 = vpop.f32.mrb[0].mxu0
      %v663 = vadd.f32 %v498, %v662
      %v664 = vpop.f32.mrb[0].mxu0
      %v665 = vpop.f32.mrb[0].mxu0
      %v666 = vadd.f32 %v498, %v665
      %v667 = vpop.f32.mrb[0].mxu0
      %668 = vmatprep.mubr.bf16.mxu0 %v450
      %669 = vmatmul.mubr.bf16.gmra.mrb[0].mxu0 %v394
      %v670 = vpop.f32.mrb[0].mxu0
      %v671 = vadd.f32 %v498, %v670
      %v672 = vpop.f32.mrb[0].mxu0
      %v673 = vpop.f32.mrb[0].mxu0
      %v674 = vadd.f32 %v498, %v673
      %v675 = vpop.f32.mrb[0].mxu0
      %676 = vmatprep.mubr.bf16.mxu0 %v451
      %677 = vmatmul.mubr.bf16.gmra.mrb[0].mxu0 %v395
      %v678 = vpop.f32.mrb[0].mxu0
      %v679 = vadd.f32 %v498, %v678
      %v680 = vpop.f32.mrb[0].mxu0
      %v681 = vpop.f32.mrb[0].mxu0
      %v682 = vadd.f32 %v498, %v681
      %v683 = vpop.f32.mrb[0].mxu0
      %684 = vmatprep.mubr.bf16.mxu0 %v452
      %685 = vmatmul.mubr.bf16.gmra.mrb[0].mxu0 %v396
      %v686 = vpop.f32.mrb[0].mxu0
      %v687 = vadd.f32 %v498, %v686
      %v688 = vpop.f32.mrb[0].mxu0
      %v689 = vpop.f32.mrb[0].mxu0
      %v690 = vadd.f32 %v498, %v689
      %v691 = vpop.f32.mrb[0].mxu0
      %692 = vdwg.mxu0
      %v693 = vmax.f32 %v631, 0.0
      %v694 = vmax.f32 %v634, 0.0
      %v695 = vmax.f32 %v639, 0.0
      %v696 = vmax.f32 %v642, 0.0
      %v697 = vmax.f32 %v647, 0.0
      %v698 = vmax.f32 %v650, 0.0
      %v699 = vmax.f32 %v655, 0.0
      %v700 = vmax.f32 %v658, 0.0
      %v701 = vmax.f32 %v663, 0.0
      %v702 = vmax.f32 %v666, 0.0
      %v703 = vmax.f32 %v671, 0.0
      %v704 = vmax.f32 %v674, 0.0
      %v705 = vmax.f32 %v679, 0.0
      %v706 = vmax.f32 %v682, 0.0
      %v707 = vmax.f32 %v687, 0.0
      %v708 = vmax.f32 %v690, 0.0
      %v709 = vpack.c.bf16 %v694, %v693
      %v710 = vpack.c.bf16 %v696, %v695
      %v711 = vpack.c.bf16 %v698, %v697
      %v712 = vpack.c.bf16 %v700, %v699
      %v713 = vpack.c.bf16 %v702, %v701
      %v714 = vpack.c.bf16 %v704, %v703
      %v715 = vpack.c.bf16 %v706, %v705
      %v716 = vpack.c.bf16 %v708, %v707
      %v725 = vunpack.c.l.b16 %v709
      %v726 = vunpack.c.h.b16 %v709
      %v727 = vunpack.c.l.b16 %v710
      %v728 = vunpack.c.h.b16 %v710
      %v729 = vunpack.c.l.b16 %v711
      %v730 = vunpack.c.h.b16 %v711
      %v731 = vunpack.c.l.b16 %v712
      %v732 = vunpack.c.h.b16 %v712
      %v733 = vunpack.c.l.b16 %v713
      %v734 = vunpack.c.h.b16 %v713
      %v735 = vunpack.c.l.b16 %v714
      %v736 = vunpack.c.h.b16 %v714
      %v737 = vunpack.c.l.b16 %v715
      %v738 = vunpack.c.h.b16 %v715
      %v739 = vunpack.c.l.b16 %v716
      %v740 = vunpack.c.h.b16 %v716
      %v741 = vpack.c.b16 %v725, %v725
      %v742 = vpack.c.b16 %v726, %v726
      %v743 = vpack.c.b16 %v727, %v727
      %v744 = vpack.c.b16 %v728, %v728
      %v745 = vpack.c.b16 %v729, %v729
      %v746 = vpack.c.b16 %v730, %v730
      %v747 = vpack.c.b16 %v731, %v731
      %v748 = vpack.c.b16 %v732, %v732
      %v749 = vpack.c.b16 %v733, %v733
      %v750 = vpack.c.b16 %v734, %v734
      %v751 = vpack.c.b16 %v735, %v735
      %v752 = vpack.c.b16 %v736, %v736
      %v753 = vpack.c.b16 %v737, %v737
      %v754 = vpack.c.b16 %v738, %v738
      %v755 = vpack.c.b16 %v739, %v739
      %v756 = vpack.c.b16 %v740, %v740
      %773 = vst [vmem:[#allocation11] sm:$0xf] %v741
      %774 = vst [vmem:[#allocation11 + $0x4] sm:$0xf] %v742
      %775 = vst [vmem:[#allocation11 + $0x8] sm:$0xf] %v743
      %776 = vst [vmem:[#allocation11 + $0xc] sm:$0xf] %v744
      %777 = vst [vmem:[#allocation11 + $0x10] sm:$0xf] %v745
      %778 = vst [vmem:[#allocation11 + $0x14] sm:$0xf] %v746
      %779 = vst [vmem:[#allocation11 + $0x18] sm:$0xf] %v747
      %780 = vst [vmem:[#allocation11 + $0x1c] sm:$0xf] %v748
      %781 = vst [vmem:[#allocation11 + $0x20] sm:$0xf] %v749
      %782 = vst [vmem:[#allocation11 + $0x24] sm:$0xf] %v750
      %783 = vst [vmem:[#allocation11 + $0x28] sm:$0xf] %v751
      %784 = vst [vmem:[#allocation11 + $0x2c] sm:$0xf] %v752
      %785 = vst [vmem:[#allocation11 + $0x30] sm:$0xf] %v753
      %786 = vst [vmem:[#allocation11 + $0x34] sm:$0xf] %v754
      %787 = vst [vmem:[#allocation11 + $0x38] sm:$0xf] %v755
      %788 = vst [vmem:[#allocation11 + $0x3c] sm:$0xf] %v756
    $region45: #{tpu_custom_call.1} parent=1 // pred_fallthru
      _
    // Predicated region
    $region46: #{tpu_custom_call.1} parent=1 // pred_check
      _
    $region47: #{tpu_custom_call.1} parent=1 // pred_check_branch
      %790 = sbr.rel (0) target = $region49
    $region48: #{tpu_custom_call.1} parent=1 // pred_region
      %s792 = ssub.s32 1024, 1024
      %793 = vsyncadd [#allocation5], %s792
      %s794 = sshll.u32 [#allocation11], 4
      %s795 = int_to_ptr.vmem [resolvable:$true] %s794
      %800 = dma.vmem_to_hbm [thread:$0]  %s795, 1024, %s5, [#allocation5], 64, 64, 4
    $region49: #{tpu_custom_call.1} parent=1 // pred_fallthru
      _
    // Predicated region
    $region50: #{tpu_custom_call.1} parent=1 // pred_check
      _
    $region51: #{tpu_custom_call.1} parent=1 // pred_check_branch
      %802 = sbr.rel (0) target = $region53
    $region52: #{tpu_custom_call.1} parent=1 // pred_region
      %803 = dma.done [#allocation5], 1024
    $region53: #{tpu_custom_call.1} parent=1 // pred_fallthru
      _
    %804 = vsyncpa [#allocation4], 1
    %805 = vsyncpa [#allocation7], 1
    %806 = vsyncpa [#allocation10], 1
    %807 = vsyncpa [#allocation5], 1

</llo_original>
